<compile_context>
chip_gen: v7x
topology: tpu7x:2x2x1
jax: 0.10.0
libtpu: 0.0.40
codegen_flags: <defaults>
</compile_context>

<pallas_src>
import functools

import jax
import jax.numpy as jnp
from jax.experimental import pallas as pl
from jax.experimental.pallas import tpu as pltpu


# ------------------------------ small helpers --------------------------------
def _round_up(x, m):
    return (x + m - 1) // m * m


def _cdiv(a, b):
    return -(-a // b)


def _pick_tile(padded, align, target):
    """Largest tile <= target that is a multiple of `align` and divides `padded`
    exactly (padded is already a multiple of `align`)."""
    units = padded // align
    cap = max(1, min(units, target // align))
    for d in range(cap, 0, -1):
        if units % d == 0:
            return d * align
    return align


# ------------------------------ Pallas kernels --------------------------------
def _matmul_bias_kernel(x_ref, w_ref, b_ref, o_ref):
    """One (tm, tn) f32 output tile, accumulated in-place over the K grid axis."""
    k = pl.program_id(2)

    @pl.when(k == 0)
    def _():
        o_ref[...] = jnp.zeros_like(o_ref)

    # f32 activations cast to bf16 in-kernel (hides under the MXU slot).
    o_ref[...] += jnp.dot(
        x_ref[...].astype(w_ref.dtype), w_ref[...],
        preferred_element_type=jnp.float32,
    )

    @pl.when(k == pl.num_programs(2) - 1)
    def _():
        o_ref[...] = o_ref[...] + b_ref[...]


def _matmul_kernel(x_ref, w_ref, o_ref):
    """Bias-free variant."""
    k = pl.program_id(2)

    @pl.when(k == 0)
    def _():
        o_ref[...] = jnp.zeros_like(o_ref)

    o_ref[...] += jnp.dot(
        x_ref[...].astype(w_ref.dtype), w_ref[...],
        preferred_element_type=jnp.float32,
    )


# ------------------------------ matmul wrapper --------------------------------
def qkv_linear_matmul(x2d, w_p, b_p=None, *,
                      target_tm=512, target_tn=1024, target_tk=1024):
    """(M, K) f32 @ pre-padded (Kp, Np) bf16 weight (+ optional (1, Np) bias).

    Returns the padded-N f32 result of shape (M, Np); caller slices columns.
    """
    M, K = x2d.shape
    Kp, Np = w_p.shape
    assert K <= Kp and Kp % 128 == 0 and Np % 128 == 0, (K, Kp, Np)

    # K / N tiles: lane-aligned divisors of the pre-padded weight extents.
    tk = _pick_tile(Kp, 128, target_tk)
    tn = _pick_tile(Np, 128, target_tn)
    n_n = Np // tn
    n_k = Kp // tk

    # M tiling: divisor-style; waste bounded by the 8-row sublane alignment.
    M8 = _round_up(M, 8)
    n_m = _cdiv(M8, target_tm)
    if n_m * n_n < 2 and M8 >= 16:
        n_m = 2  # keep >= 2 'parallel' programs so both v7x TCs get work
    tm = _round_up(_cdiv(M8, n_m), 8)
    Mp = tm * n_m

    # Zero-pad activations only (weights/bias were padded once at init).
    if Mp == M and Kp == K:
        x_p = x2d
    else:
        x_p = jnp.pad(x2d, ((0, Mp - M), (0, Kp - K)))

    grid = (n_m, n_n, n_k)

    in_specs = [
        pl.BlockSpec((tm, tk), lambda i, j, k: (i, k)),
        pl.BlockSpec((tk, tn), lambda i, j, k: (k, j)),
    ]
    operands = [x_p, w_p]
    if b_p is not None:
        in_specs.append(pl.BlockSpec((1, tn), lambda i, j, k: (0, j)))
        operands.append(b_p)
        kernel = _matmul_bias_kernel
    else:
        kernel = _matmul_kernel

    # VMEM budget: double-buffered x/w/out tiles (+ bias), explicit limit.
    xb = x_p.dtype.itemsize      # 4 (f32 activations)
    wb = w_p.dtype.itemsize      # 2 (bf16 weights)
    vmem_est = 2 * (tm * tk * xb + tk * tn * wb + tm * tn * 4) + 2 * tn * 4
    vmem_limit = int(min(64 << 20, max(32 << 20, int(vmem_est * 1.5))))

    cost = pl.CostEstimate(
        flops=2 * Mp * Kp * Np,
        transcendentals=0,
        bytes_accessed=Mp * Kp * xb + Kp * Np * wb + Mp * Np * 4
                       + (Np * 4 if b_p is not None else 0),
    )

    out = pl.pallas_call(
        kernel,
        grid_spec=pltpu.PrefetchScalarGridSpec(
            num_scalar_prefetch=0,
            grid=grid,
            in_specs=in_specs,
            out_specs=pl.BlockSpec((tm, tn), lambda i, j, k: (i, j)),
        ),
        out_shape=jax.ShapeDtypeStruct((Mp, Np), jnp.float32),
        compiler_params=pltpu.CompilerParams(
            dimension_semantics=("parallel", "parallel", "arbitrary"),
            vmem_limit_bytes=vmem_limit,
        ),
        cost_estimate=cost,
    )(*operands)

    return out[:M, :]


# ------------------------------ module wrapper --------------------------------
def prepare_qkv_params(w_f32, b_f32=None, mxu_dtype=jnp.bfloat16):
    """Pre-cast the weight to bf16 and pre-pad weight/bias to lane-aligned
    (Kp, Np) ONCE, so the per-call work is just the matmul kernel."""
    K, N = w_f32.shape
    Kp = _round_up(K, 128)
    Np = _round_up(N, 128)
    params = {
        "w": jnp.pad(w_f32.astype(mxu_dtype), ((0, Kp - K), (0, Np - N))),
    }
    if b_f32 is not None:
        params["b"] = jnp.pad(b_f32.astype(jnp.float32).reshape(1, N),
                              ((0, 0), (0, Np - N)))
    return params


def qkv_linear_forward(params, x, *, dim, qk_dim):
    """Matches QKVLinear.forward: returns (q, kv).  dim/qk_dim are static."""
    n_out = qk_dim + qk_dim + dim
    lead = x.shape[:-1]

    y = qkv_linear_matmul(x.reshape(-1, dim), params["w"], params.get("b"))
    y = y[:, :n_out].reshape(lead + (n_out,))

    q = y[..., :qk_dim]
    kv = y[..., qk_dim:]                      # size qk_dim + dim
    return q, kv


# ------------------------------------ main ------------------------------------
if __name__ == "__main__":
    key = jax.random.PRNGKey(0)
    kw, kb, kx1, kx2 = jax.random.split(key, 4)

    DIM, QK_DIM = 32, 16                      # small: batch=2, seq=8, hidden=32
    N_OUT = QK_DIM + QK_DIM + DIM

    # Original f32 parameters (torch weight.T layout), kept for the reference.
    w_f32 = jax.random.normal(kw, (DIM, N_OUT), jnp.float32) / (DIM ** 0.5)
    b_f32 = jax.random.normal(kb, (N_OUT,), jnp.float32) * 0.01

    # One-time bf16 cast + lane-alignment padding of the parameters.
    params = prepare_qkv_params(w_f32, b_f32)

    # dim / qk_dim are bound statically (they drive reshapes / splits).
    fwd = jax.jit(functools.partial(qkv_linear_forward, dim=DIM, qk_dim=QK_DIM))

    # Case 1: aligned-ish shape (B=2, L=8); Case 2: ragged (B=3, L=5).
    x1 = jax.random.normal(kx1, (2, 8, DIM), jnp.float32)
    x2 = jax.random.normal(kx2, (3, 5, DIM), jnp.float32)

    ok = True
    for x in (x1, x2):
        q, kv = fwd(params, x)
        jax.block_until_ready((q, kv))

        # Pure-JAX f32 reference (bf16 MXU weights => relaxed tolerance).
        y_ref = x @ w_f32 + b_f32
        q_ref, kv_ref = y_ref[..., :QK_DIM], y_ref[..., QK_DIM:]

        assert q.shape == x.shape[:-1] + (QK_DIM,), q.shape
        assert kv.shape == x.shape[:-1] + (QK_DIM + DIM,), kv.shape
        assert bool(jnp.all(jnp.isfinite(q))) and bool(jnp.all(jnp.isfinite(kv)))
        ok &= bool(jnp.allclose(q, q_ref, atol=5e-2, rtol=5e-2))
        ok &= bool(jnp.allclose(kv, kv_ref, atol=5e-2, rtol=5e-2))

    assert ok, "Pallas QKVLinear output mismatch vs f32 reference"
    print("KERNEL_OK")
</pallas_src>

<mosaic_0001>
module attributes {stable_mosaic.version = 11 : i64} {
  func.func @_matmul_bias_kernel(%arg0: i32, %arg1: i32, %arg2: i32, %arg3: memref<8x128xf32, #tpu.memory_space<vmem>>, %arg4: memref<128x128xbf16, #tpu.memory_space<vmem>>, %arg5: memref<1x128xf32, #tpu.memory_space<vmem>>, %arg6: memref<8x128xf32, #tpu.memory_space<vmem>>) attributes {dimension_semantics = [#tpu.dimension_semantics<parallel>, #tpu.dimension_semantics<parallel>, #tpu.dimension_semantics<arbitrary>], iteration_bounds = array<i64: 2, 1, 1>, scalar_prefetch = 0 : i64, scratch_operands = 0 : i64, tpu.core_type = #tpu.core_type<tc>, window_params = [{transform_indices = @transform_0, window_bounds = array<i64: 8, 128>}, {transform_indices = @transform_1, window_bounds = array<i64: 128, 128>}, {transform_indices = @transform_2, window_bounds = array<i64: 1, 128>}, {transform_indices = @transform_3, window_bounds = array<i64: 8, 128>}]} {
    %c0_i32 = arith.constant 0 : i32
    %0 = arith.cmpi eq, %arg2, %c0_i32 : i32
    %1 = arith.extui %0 : i1 to i32
    %c0_i32_0 = arith.constant 0 : i32
    %2 = arith.cmpi ne, %1, %c0_i32_0 : i32
    scf.if %2 {
      %cst_10 = arith.constant 0.000000e+00 : f32
      %13 = vector.broadcast %cst_10 : f32 to vector<8x128xf32>
      %c0_11 = arith.constant 0 : index
      %c0_12 = arith.constant 0 : index
      %14 = vector.load %arg6[%c0_11, %c0_12] : memref<8x128xf32, #tpu.memory_space<vmem>>, vector<8x128xf32>
      tpu.vector_store %arg6[%c0_11, %c0_12], %13 {strides = array<i32>} : memref<8x128xf32, #tpu.memory_space<vmem>>, vector<8x128xf32>,
    } else {
    }
    %c0 = arith.constant 0 : index
    %c0_1 = arith.constant 0 : index
    %3 = vector.load %arg6[%c0, %c0_1] : memref<8x128xf32, #tpu.memory_space<vmem>>, vector<8x128xf32>
    %c0_2 = arith.constant 0 : index
    %c0_3 = arith.constant 0 : index
    %4 = vector.load %arg3[%c0_2, %c0_3] : memref<8x128xf32, #tpu.memory_space<vmem>>, vector<8x128xf32>
    %5 = arith.truncf %4 : vector<8x128xf32> to vector<8x128xbf16>
    %c0_4 = arith.constant 0 : index
    %c0_5 = arith.constant 0 : index
    %6 = vector.load %arg4[%c0_4, %c0_5] : memref<128x128xbf16, #tpu.memory_space<vmem>>, vector<128x128xbf16>
    %cst = arith.constant dense<0.000000e+00> : vector<8x128xf32>
    %7 = tpu.matmul %5, %6, %cst {dimension_numbers = #tpu.dot_dimension_numbers<[1], [0], [0], [1], [0, 0, 1, 1], [], []>} : vector<8x128xbf16>, vector<128x128xbf16>, vector<8x128xf32> -> vector<8x128xf32>
    %8 = arith.addf %3, %7 : vector<8x128xf32>
    %c0_6 = arith.constant 0 : index
    %c0_7 = arith.constant 0 : index
    %9 = vector.load %arg6[%c0_6, %c0_7] : memref<8x128xf32, #tpu.memory_space<vmem>>, vector<8x128xf32>
    tpu.vector_store %arg6[%c0_6, %c0_7], %8 {strides = array<i32>} : memref<8x128xf32, #tpu.memory_space<vmem>>, vector<8x128xf32>,
    %c0_i32_8 = arith.constant 0 : i32
    %10 = arith.cmpi eq, %arg2, %c0_i32_8 : i32
    %11 = arith.extui %10 : i1 to i32
    %c0_i32_9 = arith.constant 0 : i32
    %12 = arith.cmpi ne, %11, %c0_i32_9 : i32
    scf.if %12 {
      %c0_10 = arith.constant 0 : index
      %c0_11 = arith.constant 0 : index
      %13 = vector.load %arg6[%c0_10, %c0_11] : memref<8x128xf32, #tpu.memory_space<vmem>>, vector<8x128xf32>
      %c0_12 = arith.constant 0 : index
      %c0_13 = arith.constant 0 : index
      %14 = vector.load %arg5[%c0_12, %c0_13] : memref<1x128xf32, #tpu.memory_space<vmem>>, vector<1x128xf32>
      %15 = vector.broadcast %14 : vector<1x128xf32> to vector<8x128xf32>
      %16 = arith.addf %13, %15 : vector<8x128xf32>
      %c0_14 = arith.constant 0 : index
      %c0_15 = arith.constant 0 : index
      %17 = vector.load %arg6[%c0_14, %c0_15] : memref<8x128xf32, #tpu.memory_space<vmem>>, vector<8x128xf32>
      tpu.vector_store %arg6[%c0_14, %c0_15], %16 {strides = array<i32>} : memref<8x128xf32, #tpu.memory_space<vmem>>, vector<8x128xf32>,
    } else {
    }
    return
  }
  func.func @transform_0(%arg0: i32, %arg1: i32, %arg2: i32) -> (i32, i32) {
    %c0_i32 = arith.constant 0 : i32
    return %arg0, %arg2 : i32, i32
  }
  func.func @transform_1(%arg0: i32, %arg1: i32, %arg2: i32) -> (i32, i32) {
    %c0_i32 = arith.constant 0 : i32
    return %arg2, %arg1 : i32, i32
  }
  func.func @transform_2(%arg0: i32, %arg1: i32, %arg2: i32) -> (i32, i32) {
    %c0_i32 = arith.constant 0 : i32
    %c0_i32_0 = arith.constant 0 : i32
    return %c0_i32, %arg1 : i32, i32
  }
  func.func @transform_3(%arg0: i32, %arg1: i32, %arg2: i32) -> (i32, i32) {
    %c0_i32 = arith.constant 0 : i32
    return %arg0, %arg1 : i32, i32
  }
}

</mosaic_0001>

<llo_original>
// kernel: qkv_linear_forward.1
$region0: #{qkv_linear_forward.1}
  #allocation0 [shape = 'u32[]', space=smem, size = 0x4, offset = 0x4, fixed_abs, tag = 'smem constant byte address 0x4 - core index']
  #allocation1 [shape = 'u32[144,128]{1,0:T(1,128)}', space=vmem, size = 0x12000, scoped, tag = 'internal scratch']
  %s0 = inlined_call_operand.vmem [shape: f32[16,128], index: 0, kind: input, shape index: {}]
  %s1 = inlined_call_operand.hbm [shape: bf16[128,128], index: 1, kind: input, shape index: {}]
  %s2 = inlined_call_operand.vmem [shape: f32[1,128], index: 2, kind: input, shape index: {}]
  %s3 = inlined_call_operand.vmem [shape: f32[16,128], index: 3, kind: output, shape index: {}]
  %s4 = sld [smem:[#allocation0]]
  $region57: #{qkv_linear_forward.1} parent=0
    _
  %s6 = ssub.s32 1, %s4
  %s7 = scalar_select 0, %s6, %s4
  $region1: #{qkv_linear_forward.1} parent=0
    #allocation2 [shape = 'u8[32768]{0}', space=vmem, size = 0x8000, scoped, tag = 'input window, operand 1, single buffered']
    #allocation3 [shape = 's32[2]{0}', space=sflag, size = 0x8, scoped, tag = 'scoped memory for qkv_linear_forward.1']
    %8 = vsyncpa [#allocation3], 0
    loop: start=0, step=1, limit=4
    $region2: #{qkv_linear_forward.1} parent=1 // loop_pre_header
      _
    $region3: #{qkv_linear_forward.1} parent=1 // loop_header
      %s10 = sphi 0, %s14
      %p11 = scmp.ge.s32.totalorder %s10, 4
      %s17 = sphi 0, %s36
      %s18 = sphi 0, %s32
      %s19 = sphi 0, %s28
      %s20 = sphi 0, %s17
      %s21 = sphi 0, %s18
      %s22 = sphi 0, %s19
      %s23 = sphi 0, %s20
      %s24 = sphi 0, %s21
      %s25 = sphi 0, %s22
      %s41 = sphi 0, %s43
      %s44 = sphi 0, %s41
      %s45 = sphi 0, %s44
      %s61 = sphi 0, %s45
      %s69 = sphi 0, %s71
      %s72 = sphi 0, %s69
      %s73 = sphi 0, %s72
      %s89 = sphi 0, %s73
      %s95 = sphi 0, %s97
      %s98 = sphi 0, %s95
      %s99 = sphi 0, %s98
      %s115 = sphi 0, %s99
      %s123 = sphi 0, %s125
      %s126 = sphi 0, %s123
      %s127 = sphi 0, %s126
      %s143 = sphi 0, %s127
    $region4: #{qkv_linear_forward.1} parent=1 // loop_header_branch
      %13 = sbr.rel (%p11) target = $region8
    $region5: #{qkv_linear_forward.1} parent=1 // loop_body
      %s15 = ssub.s32 %s10, 1
      %s16 = ssub.s32 %s10, 2
      %s26 = sadd.s32 1, %s19
      %p27 = scmp.ge.s32.totalorder %s26, 1
      %s28 = scalar_select %p27, 0, %s26
      %s29 = sadd.s32 1, %s18
      %s30 = scalar_select %p27, %s29, %s18
      %p31 = scmp.ge.s32.totalorder %s30, 1
      %s32 = scalar_select %p31, 0, %s30
      %s33 = sadd.s32 1, %s17
      %s34 = scalar_select %p31, %s33, %s17
      %p35 = scmp.ge.s32.totalorder %s34, 2
      %s36 = scalar_select %p35, 0, %s34
      %s37 = ssub.s32 %s17, %s36
      %s38 = ssub.s32 %s19, %s28
      %s39 = sor.u32 %s37, %s38
      %p40 = scmp.eq.s32.totalorder %s39, 0
      %s42 = sadd.s32 %s41, 1
      %s43 = scalar_select %p40, %s41, %s42
      %p46 = pneg %p40
      %p47 = scmp.eq.s32.totalorder %s10, 1
      %p48 = por %p46, %p47
      %p49 = scmp.ne.s32.totalorder %s41, %s44
      %p50 = scmp.eq.s32.totalorder %s10, 0
      %p51 = por %p49, %p50
      %p52 = scmp.ne.s32.totalorder %s41, %s44
      %p53 = scmp.eq.s32.totalorder %s15, 1
      %p54 = por %p52, %p53
      %p55 = scmp.ne.s32.totalorder %s44, %s45
      %p56 = scmp.eq.s32.totalorder %s15, 0
      %p57 = por %p55, %p56
      %p58 = scmp.ne.s32.totalorder %s44, %s45
      %p59 = scmp.eq.s32.totalorder %s16, 1
      %p60 = por %p58, %p59
      %p62 = scmp.ne.s32.totalorder %s45, %s61
      %p63 = scmp.eq.s32.totalorder %s16, 0
      %p64 = por %p62, %p63
      %s65 = ssub.s32 %s19, %s28
      %s66 = ssub.s32 %s18, %s32
      %s67 = sor.u32 %s65, %s66
      %p68 = scmp.eq.s32.totalorder %s67, 0
      %s70 = sadd.s32 %s69, 1
      %s71 = scalar_select %p68, %s69, %s70
      %p74 = pneg %p68
      %p75 = scmp.eq.s32.totalorder %s10, 1
      %p76 = por %p74, %p75
      %p77 = scmp.ne.s32.totalorder %s69, %s72
      %p78 = scmp.eq.s32.totalorder %s10, 0
      %p79 = por %p77, %p78
      %p80 = scmp.ne.s32.totalorder %s69, %s72
      %p81 = scmp.eq.s32.totalorder %s15, 1
      %p82 = por %p80, %p81
      %p83 = scmp.ne.s32.totalorder %s72, %s73
      %p84 = scmp.eq.s32.totalorder %s15, 0
      %p85 = por %p83, %p84
      %p86 = scmp.ne.s32.totalorder %s72, %s73
      %p87 = scmp.eq.s32.totalorder %s16, 1
      %p88 = por %p86, %p87
      %p90 = scmp.ne.s32.totalorder %s73, %s89
      %p91 = scmp.eq.s32.totalorder %s16, 0
      %p92 = por %p90, %p91
      %s93 = ssub.s32 %s18, %s32
      %p94 = scmp.eq.s32.totalorder %s93, 0
      %s96 = sadd.s32 %s95, 1
      %s97 = scalar_select %p94, %s95, %s96
      %p100 = pneg %p94
      %p101 = scmp.eq.s32.totalorder %s10, 1
      %p102 = por %p100, %p101
      %p103 = scmp.ne.s32.totalorder %s95, %s98
      %p104 = scmp.eq.s32.totalorder %s10, 0
      %p105 = por %p103, %p104
      %p106 = scmp.ne.s32.totalorder %s95, %s98
      %p107 = scmp.eq.s32.totalorder %s15, 1
      %p108 = por %p106, %p107
      %p109 = scmp.ne.s32.totalorder %s98, %s99
      %p110 = scmp.eq.s32.totalorder %s15, 0
      %p111 = por %p109, %p110
      %p112 = scmp.ne.s32.totalorder %s98, %s99
      %p113 = scmp.eq.s32.totalorder %s16, 1
      %p114 = por %p112, %p113
      %p116 = scmp.ne.s32.totalorder %s99, %s115
      %p117 = scmp.eq.s32.totalorder %s16, 0
      %p118 = por %p116, %p117
      %s119 = ssub.s32 %s17, %s36
      %s120 = ssub.s32 %s18, %s32
      %s121 = sor.u32 %s119, %s120
      %p122 = scmp.eq.s32.totalorder %s121, 0
      %s124 = sadd.s32 %s123, 1
      %s125 = scalar_select %p122, %s123, %s124
      %p128 = pneg %p122
      %p129 = scmp.eq.s32.totalorder %s10, 1
      %p130 = por %p128, %p129
      %p131 = scmp.ne.s32.totalorder %s123, %s126
      %p132 = scmp.eq.s32.totalorder %s10, 0
      %p133 = por %p131, %p132
      %p134 = scmp.ne.s32.totalorder %s123, %s126
      %p135 = scmp.eq.s32.totalorder %s15, 1
      %p136 = por %p134, %p135
      %p137 = scmp.ne.s32.totalorder %s126, %s127
      %p138 = scmp.eq.s32.totalorder %s15, 0
      %p139 = por %p137, %p138
      %p140 = scmp.ne.s32.totalorder %s126, %s127
      %p141 = scmp.eq.s32.totalorder %s16, 1
      %p142 = por %p140, %p141
      %p144 = scmp.ne.s32.totalorder %s127, %s143
      %p145 = scmp.eq.s32.totalorder %s16, 0
      %p146 = por %p144, %p145
      %p147 = scmp.le.s32.totalorder 1, %s10
      %p148 = scmp.lt.s32.totalorder %s10, 3
      %p149 = pnand %p147, %p148
      %p150 = pneg %p149
      // Predicated region
      $region9: #{qkv_linear_forward.1} parent=5 // pred_check
        _
      $region10: #{qkv_linear_forward.1} parent=5 // pred_check_branch
        %152 = sbr.rel (%p149) target = $region12
      $region11: #{qkv_linear_forward.1} parent=5 // pred_region
        %s153 = ssub.s32 %s10, 1
        // Predicated region
        $region13: #{qkv_linear_forward.1} parent=11 // pred_check
          %p154 = pneg %p85
        $region14: #{qkv_linear_forward.1} parent=11 // pred_check_branch
          %156 = sbr.rel (%p154) target = $region16
        $region15: #{qkv_linear_forward.1} parent=11 // pred_region
          %s157 = smul.u32 16, %s22
          %s159 = ssub.s32 1024, 1024
          %160 = vsyncadd [#allocation3], %s159
          %s161 = sadd.s32 %s21, %s157
          %s162 = smul.addr %s161, 64
          %s163 = scalar_lea.hbm %s1, %s162
          %s164 = sshll.u32 [#allocation2], 4
          %s165 = int_to_ptr.vmem [resolvable:$true] %s164
          %170 = dma.hbm_to_vmem [thread:$0]  %s163, 1024, %s165, [#allocation3], 64, 64, 4
        $region16: #{qkv_linear_forward.1} parent=11 // pred_fallthru
          _
        // Predicated region
        $region17: #{qkv_linear_forward.1} parent=11 // pred_check
          %p171 = pneg %p111
        $region18: #{qkv_linear_forward.1} parent=11 // pred_check_branch
          %173 = sbr.rel (%p171) target = $region20
        $region19: #{qkv_linear_forward.1} parent=11 // pred_region
          %p174 = scmp.lt.s32.totalorder %s21, 0
          %s175 = scalar_select %p174, %s21, 0
          %s176 = scalar_lea.vmem %s2, %s175
        $region20: #{qkv_linear_forward.1} parent=11 // pred_fallthru
          _
      $region12: #{qkv_linear_forward.1} parent=5 // pred_fallthru
        _
      %p177 = scmp.lt.s32.totalorder %s10, 2
      // Predicated region
      $region21: #{qkv_linear_forward.1} parent=5 // pred_check
        %p178 = pneg %p177
      $region22: #{qkv_linear_forward.1} parent=5 // pred_check_branch
        %180 = sbr.rel (%p178) target = $region24
      $region23: #{qkv_linear_forward.1} parent=5 // pred_region
        // Predicated region
        $region25: #{qkv_linear_forward.1} parent=23 // pred_check
          %p181 = pneg %p51
        $region26: #{qkv_linear_forward.1} parent=23 // pred_check_branch
          %183 = sbr.rel (%p181) target = $region28
        $region27: #{qkv_linear_forward.1} parent=23 // pred_region
          %p184 = scmp.lt.s32.totalorder %s17, 1
          %s185 = scalar_select %p184, %s17, 1
          %p186 = scmp.lt.s32.totalorder %s19, 0
          %s187 = scalar_select %p186, %s19, 0
          %s188 = sadd.s32 %s187, %s185
          %s189 = smul.addr %s188, 8
          %s190 = scalar_lea.vmem %s0, %s189
        $region28: #{qkv_linear_forward.1} parent=23 // pred_fallthru
          _
      $region24: #{qkv_linear_forward.1} parent=5 // pred_fallthru
        _
      %p191 = scmp.le.s32.totalorder 1, %s10
      %p192 = scmp.lt.s32.totalorder %s10, 3
      %p193 = pnand %p191, %p192
      %p194 = pneg %p193
      // Predicated region
      $region29: #{qkv_linear_forward.1} parent=5 // pred_check
        _
      $region30: #{qkv_linear_forward.1} parent=5 // pred_check_branch
        %196 = sbr.rel (%p193) target = $region32
      $region31: #{qkv_linear_forward.1} parent=5 // pred_region
        %s197 = ssub.s32 %s10, 1
        // Predicated region
        $region33: #{qkv_linear_forward.1} parent=31 // pred_check
          %p198 = pneg %p85
        $region34: #{qkv_linear_forward.1} parent=31 // pred_check_branch
          %200 = sbr.rel (%p198) target = $region36
        $region35: #{qkv_linear_forward.1} parent=31 // pred_region
          %201 = dma.done [#allocation3], 1024
        $region36: #{qkv_linear_forward.1} parent=31 // pred_fallthru
          _
        %p202 = scmp.lt.s32.totalorder %s20, 1
        %s203 = scalar_select %p202, %s20, 1
        %p204 = scmp.lt.s32.totalorder %s22, 0
        %s205 = scalar_select %p204, %s22, 0
        %s206 = sadd.s32 %s205, %s203
        %s207 = smul.addr %s206, 8
        %s208 = scalar_lea.vmem %s0, %s207
        %p209 = pneg %p57
        %p210 = pneg %p54
        %p211 = pneg %p85
        %p212 = pneg %p82
        %p213 = scmp.lt.s32.totalorder %s21, 0
        %s214 = scalar_select %p213, %s21, 0
        %s215 = scalar_lea.vmem %s2, %s214
        %p216 = pneg %p111
        %p217 = pneg %p108
        %p218 = pneg %p139
        %p219 = pneg %p136
        %p220 = scmp.lt.s32.totalorder %s20, 1
        %s221 = scalar_select %p220, %s20, 1
        %p222 = scmp.lt.s32.totalorder %s21, 0
        %s223 = scalar_select %p222, %s21, 0
        %s224 = sadd.s32 %s223, %s221
        %s225 = smul.addr %s224, 8
        %s226 = scalar_lea.vmem %s3, %s225
        %p227 = scmp.lt.s32.totalorder %s20, 1
        %s228 = scalar_select %p227, %s20, 1
        %p229 = scmp.lt.s32.totalorder %s22, 0
        %s230 = scalar_select %p229, %s22, 0
        %s231 = sadd.s32 %s230, %s228
        %s232 = smul.addr %s231, 8
        %s233 = scalar_lea.vmem %s0, %s232
        %s234 = smul.u32 16, %s22
        %p235 = scmp.lt.s32.totalorder %s21, 0
        %s236 = scalar_select %p235, %s21, 0
        %s237 = scalar_lea.vmem %s2, %s236
        %p238 = scmp.lt.s32.totalorder %s20, 1
        %s239 = scalar_select %p238, %s20, 1
        %p240 = scmp.lt.s32.totalorder %s21, 0
        %s241 = scalar_select %p240, %s21, 0
        %s242 = sadd.s32 %s241, %s239
        %s243 = smul.addr %s242, 8
        %s244 = scalar_lea.vmem %s3, %s243
        %p246 = scmp.eq.s32.totalorder %s22, 0
        // Predicated region
        $region37: #{qkv_linear_forward.1} parent=31 // pred_check
          %p247 = pneg %p246
        $region38: #{qkv_linear_forward.1} parent=31 // pred_check_branch
          %249 = sbr.rel (%p247) target = $region40
        $region39: #{qkv_linear_forward.1} parent=31 // pred_region
          %250 = vst [vmem:[%s244] sm:$0xff] 0.0
        $region40: #{qkv_linear_forward.1} parent=31 // pred_fallthru
          _
        %v251 = vld [vmem:[%s244] sm:$0xff]
        %v252 = vld [vmem:[%s233] sm:$0xff]
        %v253 = vpack.c.bf16 %v252, %v252
        %v254 = vld [vmem:[#allocation2] sm:$0xf]
        %v255 = vld [vmem:[#allocation2 + $0x4] sm:$0xf]
        %v256 = vld [vmem:[#allocation2 + $0x8] sm:$0xf]
        %v257 = vld [vmem:[#allocation2 + $0xc] sm:$0xf]
        %v258 = vld [vmem:[#allocation2 + $0x10] sm:$0xf]
        %v259 = vld [vmem:[#allocation2 + $0x14] sm:$0xf]
        %v260 = vld [vmem:[#allocation2 + $0x18] sm:$0xf]
        %v261 = vld [vmem:[#allocation2 + $0x1c] sm:$0xf]
        %v262 = vld [vmem:[#allocation2 + $0x20] sm:$0xf]
        %v263 = vld [vmem:[#allocation2 + $0x24] sm:$0xf]
        %v264 = vld [vmem:[#allocation2 + $0x28] sm:$0xf]
        %v265 = vld [vmem:[#allocation2 + $0x2c] sm:$0xf]
        %v266 = vld [vmem:[#allocation2 + $0x30] sm:$0xf]
        %v267 = vld [vmem:[#allocation2 + $0x34] sm:$0xf]
        %v268 = vld [vmem:[#allocation2 + $0x38] sm:$0xf]
        %v269 = vld [vmem:[#allocation2 + $0x3c] sm:$0xf]
        %v286 = vunpack.c.l.b16 %v254
        %v287 = vunpack.c.l.b16 %v255
        %v288 = vunpack.c.l.b16 %v256
        %v289 = vunpack.c.l.b16 %v257
        %v290 = vunpack.c.l.b16 %v258
        %v291 = vunpack.c.l.b16 %v259
        %v292 = vunpack.c.l.b16 %v260
        %v293 = vunpack.c.l.b16 %v261
        %v294 = vunpack.c.l.b16 %v262
        %v295 = vunpack.c.l.b16 %v263
        %v296 = vunpack.c.l.b16 %v264
        %v297 = vunpack.c.l.b16 %v265
        %v298 = vunpack.c.l.b16 %v266
        %v299 = vunpack.c.l.b16 %v267
        %v300 = vunpack.c.l.b16 %v268
        %v301 = vunpack.c.l.b16 %v269
        %v302 = vpack.c.b16 %v287, %v286
        %v303 = vpack.c.b16 %v289, %v288
        %v304 = vpack.c.b16 %v291, %v290
        %v305 = vpack.c.b16 %v293, %v292
        %v306 = vpack.c.b16 %v295, %v294
        %v307 = vpack.c.b16 %v297, %v296
        %v308 = vpack.c.b16 %v299, %v298
        %v309 = vpack.c.b16 %v301, %v300
        %318 = vmatprep.subr.bf16.mxu0 0
        %319 = vmatpush1.bf16.msra.mxu0 %v302
        %320 = vmatprep.subr.bf16.mxu0 0
        %321 = vmatpush1.bf16.msra.mxu0 %v303
        %322 = vmatprep.subr.bf16.mxu0 0
        %323 = vmatpush1.bf16.msra.mxu0 %v304
        %324 = vmatprep.subr.bf16.mxu0 0
        %325 = vmatpush1.bf16.msra.mxu0 %v305
        %326 = vmatprep.subr.bf16.mxu0 0
        %327 = vmatpush1.bf16.msra.mxu0 %v306
        %328 = vmatprep.subr.bf16.mxu0 0
        %329 = vmatpush1.bf16.msra.mxu0 %v307
        %330 = vmatprep.subr.bf16.mxu0 0
        %331 = vmatpush1.bf16.msra.mxu0 %v308
        %332 = vmatprep.subr.bf16.mxu0 0
        %333 = vmatpush1.bf16.msra.mxu0 %v309
        %334 = vmatprep.subr.bf16.mxu0 0
        %335 = vmatpush1.bf16.msra.mxu0 0
        %336 = vmatprep.subr.bf16.mxu0 0
        %337 = vmatpush1.bf16.msra.mxu0 0
        %338 = vmatprep.subr.bf16.mxu0 0
        %339 = vmatpush1.bf16.msra.mxu0 0
        %340 = vmatprep.subr.bf16.mxu0 0
        %341 = vmatpush1.bf16.msra.mxu0 0
        %342 = vmatprep.subr.bf16.mxu0 0
        %343 = vmatpush1.bf16.msra.mxu0 0
        %344 = vmatprep.subr.bf16.mxu0 0
        %345 = vmatpush1.bf16.msra.mxu0 0
        %346 = vmatprep.subr.bf16.mxu0 0
        %347 = vmatpush1.bf16.msra.mxu0 0
        %348 = vmatprep.subr.bf16.mxu0 0
        %349 = vmatpush1.bf16.msra.mxu0 0
        %350 = vmatprep.mubr.bf16.mxu0 0
        %351 = vmatmul.mubr.bf16.gmra.mrb[0].mxu0 %v253
        %v352 = vpop.f32.mrb[0].mxu0
        %v353 = vadd.f32 0.0, %v352
        %v354 = vpop.f32.mrb[0].mxu0
        %v355 = vpop.f32.mrb[0].mxu0
        %v356 = vpop.f32.mrb[0].mxu0
        %357 = vdwg.mxu0
        %v358 = vadd.f32 %v251, %v353
        %359 = vst [vmem:[%s244] sm:$0xff] %v358
        // Predicated region
        $region41: #{qkv_linear_forward.1} parent=31 // pred_check
          %p360 = pneg %p246
        $region42: #{qkv_linear_forward.1} parent=31 // pred_check_branch
          %362 = sbr.rel (%p360) target = $region44
        $region43: #{qkv_linear_forward.1} parent=31 // pred_region
          %v363 = vld [vmem:[%s244] sm:$0xff]
          %v364 = vld [vmem:[%s237] sm:$0x1]
          %v366 = vlaneseq
          %v367 = vshrl.u32 %v366, 7
          %v368 = vsub.s32 0, %v367
          %v369 = vrot.slane %v364, %v368
          %v371 = vadd.f32 %v363, %v369
          %372 = vst [vmem:[%s244] sm:$0xff] %v371
        $region44: #{qkv_linear_forward.1} parent=31 // pred_fallthru
          _
        %p373 = scmp.lt.s32.totalorder %s20, 1
        %s374 = scalar_select %p373, %s20, 1
        %p375 = scmp.lt.s32.totalorder %s21, 0
        %s376 = scalar_select %p375, %s21, 0
        %s377 = sadd.s32 %s376, %s374
        %s378 = smul.addr %s377, 8
        %s379 = scalar_lea.vmem %s3, %s378
        // Predicated region
        $region45: #{qkv_linear_forward.1} parent=31 // pred_check
          %p380 = pneg %p136
        $region46: #{qkv_linear_forward.1} parent=31 // pred_check_branch
          %382 = sbr.rel (%p380) target = $region48
        $region47: #{qkv_linear_forward.1} parent=31 // pred_region
          _
        $region48: #{qkv_linear_forward.1} parent=31 // pred_fallthru
          _
      $region32: #{qkv_linear_forward.1} parent=5 // pred_fallthru
        _
      %p383 = scmp.le.s32.totalorder 2, %s10
      // Predicated region
      $region49: #{qkv_linear_forward.1} parent=5 // pred_check
        %p384 = pneg %p383
      $region50: #{qkv_linear_forward.1} parent=5 // pred_check_branch
        %386 = sbr.rel (%p384) target = $region52
      $region51: #{qkv_linear_forward.1} parent=5 // pred_region
        %s387 = ssub.s32 %s10, 2
        // Predicated region
        $region53: #{qkv_linear_forward.1} parent=51 // pred_check
          %p388 = pneg %p142
        $region54: #{qkv_linear_forward.1} parent=51 // pred_check_branch
          %390 = sbr.rel (%p388) target = $region56
        $region55: #{qkv_linear_forward.1} parent=51 // pred_region
          %p391 = scmp.lt.s32.totalorder %s23, 1
          %s392 = scalar_select %p391, %s23, 1
          %p393 = scmp.lt.s32.totalorder %s24, 0
          %s394 = scalar_select %p393, %s24, 0
          %s395 = sadd.s32 %s394, %s392
          %s396 = smul.addr %s395, 8
          %s397 = scalar_lea.vmem %s3, %s396
        $region56: #{qkv_linear_forward.1} parent=51 // pred_fallthru
          _
      $region52: #{qkv_linear_forward.1} parent=5 // pred_fallthru
        _
    $region6: #{qkv_linear_forward.1} parent=1 // loop_footer
      %s14 = sadd.s32 1, %s10
    $region7: #{qkv_linear_forward.1} parent=1 // loop_footer_branch
      %9 = sbr.rel target = $region3
    $region8: #{qkv_linear_forward.1} parent=1 // loop_exit
      _
    %398 = vsyncpa [#allocation3], 1
    %s399 = scalar_lea.sflag [#allocation3], 1
    %400 = vsyncpa %s399, 1

</llo_original>
